<compile_context>
chip_gen: v7x
topology: tpu7x:2x2x1
jax: 0.10.0
libtpu: 0.0.40
codegen_flags: <defaults>
</compile_context>

<pallas_src>
import jax
import jax.numpy as jnp
from jax.experimental import pallas as pl
from jax.experimental.pallas import tpu as pltpu


def _make_edge_kernel(H, W):
    L = H * W

    def kernel(ml_ref, mr_ref, x_ref, o_ref):
        # ml_ref/mr_ref: (1, L) f32 masks (0 at column j==0 / j==W-1, else 1)
        # x_ref/o_ref:   (bn, L) input / output blocks
        x = x_ref[...].astype(jnp.float32)
        bn = x.shape[0]

        # Vertical difference d[i,j] = x[i+1,j] - x[i-1,j] with zero padding.
        # On the flat row-major view this is a +/-W lane shift with zero fill
        # at the array ends; the column index is preserved, so no masking.
        if H > 1:
            zrow = jnp.zeros((bn, W), jnp.float32)
            x_dn = jnp.concatenate([x[:, W:], zrow], axis=1)       # x[i+1, j]
            x_up = jnp.concatenate([zrow, x[:, :L - W]], axis=1)   # x[i-1, j]
            d = x_dn - x_up
        else:
            d = jnp.zeros_like(x)

        # Horizontal [1,2,1] smoothing: y[i,j] = d[i,j-1] + 2 d[i,j] + d[i,j+1]
        # with zero padding.  The +/-1 lane shifts wrap across row boundaries;
        # the precomputed masks zero those wrapped contributions.
        if L > 1:
            zcol = jnp.zeros((bn, 1), jnp.float32)
            d_left = jnp.concatenate([zcol, d[:, :L - 1]], axis=1)   # d[i, j-1]
            d_right = jnp.concatenate([d[:, 1:], zcol], axis=1)      # d[i, j+1]
            y = ml_ref[...] * d_left + 2.0 * d + mr_ref[...] * d_right
        else:
            y = 2.0 * d

        o_ref[...] = y.astype(o_ref.dtype)

    return kernel


def _divisors(n):
    ds = set()
    i = 1
    while i * i <= n:
        if n % i == 0:
            ds.add(i)
            ds.add(n // i)
        i += 1
    return sorted(ds)


def _pick_batch_block(N, cap):
    """Largest divisor of N that fits the VMEM cap and keeps the block's
    second-minor (batch) dim sublane-aligned (multiple of 8) or full-batch."""
    divs = _divisors(N)
    aligned = [d for d in divs if d % 8 == 0 and d <= cap]
    if N <= cap:
        multi = [d for d in aligned if d <= N // 2]
        if multi:
            return max(multi)      # aligned AND >= 2 grid steps (megacore)
        return N                   # whole batch in one block (== full dim)
    if aligned:
        return max(aligned)
    small = [d for d in divs if d <= cap]
    return max(small) if small else 1   # rare: sublane-unaligned fallback


def horizontal_edge_conv(x, *, vmem_block_budget_bytes=8 << 20):
    """x: (N, 1, H, W) -> (N, 1, H, W); fixed 3x3 horizontal-edge conv, padding=1."""
    N, C, H, W = x.shape
    assert C == 1, "HorizontalEdgeDetectionCNN expects a single input channel"
    L = H * W
    x_flat = x.reshape(N, L)                 # free reshape: lane-dense view

    # Row-boundary masks (computed once per call, tiny; constant under jit).
    col = jnp.arange(L, dtype=jnp.int32) % W
    ml = (col != 0).astype(jnp.float32).reshape(1, L)        # has left neighbor
    mr = (col != W - 1).astype(jnp.float32).reshape(1, L)    # has right neighbor

    # VMEM in flight per image: double-buffered in/out blocks + ~6 f32 temps.
    itemsize = jnp.dtype(x.dtype).itemsize
    per_image = L * (4 * itemsize + 6 * 4)
    cap = max(1, vmem_block_budget_bytes // per_image)
    bn = _pick_batch_block(N, cap)
    grid = (N // bn,)

    cost = pl.CostEstimate(
        flops=6 * N * L,
        transcendentals=0,
        bytes_accessed=2 * N * L * itemsize + 2 * L * 4,
    )

    out_flat = pl.pallas_call(
        _make_edge_kernel(H, W),
        out_shape=jax.ShapeDtypeStruct((N, L), x.dtype),
        grid=grid,
        in_specs=[
            pl.BlockSpec((1, L), lambda b: (0, 0)),    # left-neighbor mask
            pl.BlockSpec((1, L), lambda b: (0, 0)),    # right-neighbor mask
            pl.BlockSpec((bn, L), lambda b: (b, 0)),   # input block
        ],
        out_specs=pl.BlockSpec((bn, L), lambda b: (b, 0)),
        compiler_params=pltpu.CompilerParams(
            dimension_semantics=("parallel",)),
        cost_estimate=cost,
    )(ml, mr, x_flat)

    return out_flat.reshape(N, C, H, W)


def make_filter():
    # Deterministic weight initialization, exactly as define_filter() does.
    return jnp.array([[-1.0, -2.0, -1.0],
                      [0.0, 0.0, 0.0],
                      [1.0, 2.0, 1.0]], dtype=jnp.float32)


if __name__ == "__main__":
    key = jax.random.PRNGKey(0)
    N, C, H, W = 2, 1, 16, 16
    x = jax.random.normal(key, (N, C, H, W), dtype=jnp.float32)

    run = jax.jit(horizontal_edge_conv)
    out = jax.block_until_ready(run(x))

    # Reference: XLA conv with the module's fixed filter (cross-correlation,
    # stride 1, SAME-1 zero padding, no bias) — identical to the PyTorch forward.
    w = make_filter()
    ref = jax.lax.conv_general_dilated(
        x, w.reshape(1, 1, 3, 3),
        window_strides=(1, 1), padding=((1, 1), (1, 1)),
        dimension_numbers=("NCHW", "OIHW", "NCHW"))

    assert out.shape == (N, C, H, W)
    assert jnp.allclose(out, ref, atol=1e-5, rtol=1e-5)

    print("KERNEL_OK")
</pallas_src>

<mosaic_0001>
module attributes {stable_mosaic.version = 11 : i64} {
  func.func @kernel(%arg0: i32, %arg1: memref<1x256xf32, #tpu.memory_space<vmem>>, %arg2: memref<1x256xf32, #tpu.memory_space<vmem>>, %arg3: memref<2x256xf32, #tpu.memory_space<vmem>>, %arg4: memref<2x256xf32, #tpu.memory_space<vmem>>) attributes {dimension_semantics = [#tpu.dimension_semantics<parallel>], iteration_bounds = array<i64: 1>, scalar_prefetch = 0 : i64, scratch_operands = 0 : i64, tpu.core_type = #tpu.core_type<tc>, window_params = [{pipeline_mode = #tpu.pipeline_mode<synchronous>, transform_indices = @transform_0, window_bounds = array<i64: 1, 256>}, {pipeline_mode = #tpu.pipeline_mode<synchronous>, transform_indices = @transform_1, window_bounds = array<i64: 1, 256>}, {transform_indices = @transform_2, window_bounds = array<i64: 2, 256>}, {transform_indices = @transform_3, window_bounds = array<i64: 2, 256>}]} {
    %c0 = arith.constant 0 : index
    %c0_0 = arith.constant 0 : index
    %0 = vector.load %arg3[%c0, %c0_0] : memref<2x256xf32, #tpu.memory_space<vmem>>, vector<2x256xf32>
    %cst = arith.constant 0.000000e+00 : f32
    %1 = vector.broadcast %cst : f32 to vector<2x16xf32>
    %2 = vector.extract_strided_slice %0 {offsets = [0, 16], sizes = [2, 240], strides = [1, 1]} : vector<2x256xf32> to vector<2x240xf32>
    %3 = tpu.concatenate %2, %1 in 1 : vector<2x240xf32>, vector<2x16xf32> -> vector<2x256xf32>
    %4 = vector.extract_strided_slice %0 {offsets = [0, 0], sizes = [2, 240], strides = [1, 1]} : vector<2x256xf32> to vector<2x240xf32>
    %5 = tpu.concatenate %1, %4 in 1 : vector<2x16xf32>, vector<2x240xf32> -> vector<2x256xf32>
    %6 = arith.subf %3, %5 : vector<2x256xf32>
    %cst_1 = arith.constant 0.000000e+00 : f32
    %7 = vector.broadcast %cst_1 : f32 to vector<2x1xf32>
    %8 = vector.extract_strided_slice %6 {offsets = [0, 0], sizes = [2, 255], strides = [1, 1]} : vector<2x256xf32> to vector<2x255xf32>
    %9 = tpu.concatenate %7, %8 in 1 : vector<2x1xf32>, vector<2x255xf32> -> vector<2x256xf32>
    %10 = vector.extract_strided_slice %6 {offsets = [0, 1], sizes = [2, 255], strides = [1, 1]} : vector<2x256xf32> to vector<2x255xf32>
    %11 = tpu.concatenate %10, %7 in 1 : vector<2x255xf32>, vector<2x1xf32> -> vector<2x256xf32>
    %c0_2 = arith.constant 0 : index
    %c0_3 = arith.constant 0 : index
    %12 = vector.load %arg1[%c0_2, %c0_3] : memref<1x256xf32, #tpu.memory_space<vmem>>, vector<1x256xf32>
    %13 = vector.broadcast %12 : vector<1x256xf32> to vector<2x256xf32>
    %14 = arith.mulf %13, %9 : vector<2x256xf32>
    %cst_4 = arith.constant 2.000000e+00 : f32
    %15 = vector.broadcast %cst_4 : f32 to vector<2x256xf32>
    %16 = arith.mulf %15, %6 : vector<2x256xf32>
    %17 = arith.addf %14, %16 : vector<2x256xf32>
    %c0_5 = arith.constant 0 : index
    %c0_6 = arith.constant 0 : index
    %18 = vector.load %arg2[%c0_5, %c0_6] : memref<1x256xf32, #tpu.memory_space<vmem>>, vector<1x256xf32>
    %19 = vector.broadcast %18 : vector<1x256xf32> to vector<2x256xf32>
    %20 = arith.mulf %19, %11 : vector<2x256xf32>
    %21 = arith.addf %17, %20 : vector<2x256xf32>
    %c0_7 = arith.constant 0 : index
    %c0_8 = arith.constant 0 : index
    %22 = vector.load %arg4[%c0_7, %c0_8] : memref<2x256xf32, #tpu.memory_space<vmem>>, vector<2x256xf32>
    tpu.vector_store %arg4[%c0_7, %c0_8], %21 {strides = array<i32>} : memref<2x256xf32, #tpu.memory_space<vmem>>, vector<2x256xf32>,
    return
  }
  func.func @transform_0(%arg0: i32) -> (i32, i32) {
    %c0_i32 = arith.constant 0 : i32
    %c0_i32_0 = arith.constant 0 : i32
    %c0_i32_1 = arith.constant 0 : i32
    return %c0_i32, %c0_i32_0 : i32, i32
  }
  func.func @transform_1(%arg0: i32) -> (i32, i32) {
    %c0_i32 = arith.constant 0 : i32
    %c0_i32_0 = arith.constant 0 : i32
    %c0_i32_1 = arith.constant 0 : i32
    return %c0_i32, %c0_i32_0 : i32, i32
  }
  func.func @transform_2(%arg0: i32) -> (i32, i32) {
    %c0_i32 = arith.constant 0 : i32
    %c0_i32_0 = arith.constant 0 : i32
    return %arg0, %c0_i32 : i32, i32
  }
  func.func @transform_3(%arg0: i32) -> (i32, i32) {
    %c0_i32 = arith.constant 0 : i32
    %c0_i32_0 = arith.constant 0 : i32
    return %arg0, %c0_i32 : i32, i32
  }
}

</mosaic_0001>

<llo_original>
// kernel: horizontal_edge_conv.1
$region0: #{horizontal_edge_conv.1}
  #allocation0 [shape = 'u32[]', space=smem, size = 0x4, offset = 0x4, fixed_abs, tag = 'smem constant byte address 0x4 - core index']
  #allocation1 [shape = 'u32[144,128]{1,0:T(1,128)}', space=vmem, size = 0x12000, scoped, tag = 'internal scratch']
  %s0 = inlined_call_operand.vmem [shape: f32[1,256], index: 0, kind: input, shape index: {}]
  %s1 = inlined_call_operand.vmem [shape: f32[1,256], index: 1, kind: input, shape index: {}]
  %s2 = inlined_call_operand.vmem [shape: f32[2,256], index: 2, kind: input, shape index: {}]
  %s3 = inlined_call_operand.vmem [shape: f32[2,256], index: 3, kind: output, shape index: {}]
  %s4 = sld [smem:[#allocation0]]
  $region22: #{horizontal_edge_conv.1} parent=0
    _
  %s6 = ssub.s32 1, %s4
  %s7 = scalar_select 0, %s6, %s4
  // Predicated region
  $region2: #{horizontal_edge_conv.1} parent=0 // pred_check
    _
  $region3: #{horizontal_edge_conv.1} parent=0 // pred_check_branch
    %9 = sbr.rel (0) target = $region5
  $region4: #{horizontal_edge_conv.1} parent=0 // pred_region
    _
  $region5: #{horizontal_edge_conv.1} parent=0 // pred_fallthru
    _
  // Predicated region
  $region6: #{horizontal_edge_conv.1} parent=0 // pred_check
    _
  $region7: #{horizontal_edge_conv.1} parent=0 // pred_check_branch
    %11 = sbr.rel (0) target = $region9
  $region8: #{horizontal_edge_conv.1} parent=0 // pred_region
    _
  $region9: #{horizontal_edge_conv.1} parent=0 // pred_fallthru
    _
  // Predicated region
  $region10: #{horizontal_edge_conv.1} parent=0 // pred_check
    _
  $region11: #{horizontal_edge_conv.1} parent=0 // pred_check_branch
    %13 = sbr.rel (0) target = $region13
  $region12: #{horizontal_edge_conv.1} parent=0 // pred_region
    _
  $region13: #{horizontal_edge_conv.1} parent=0 // pred_fallthru
    _
  %v14 = vld [vmem:[%s2] sm:$0xf]
  %v17 = vunpack.c.l.s4 1983009808
  %v18 = vunpack.c.0.s8 %v17
  %v19 = vlaneseq
  %v20 = vshrl.u32 %v19, 7
  %v21 = vsub.s32 %v18, %v20
  %v22 = vrot.slane %v14, %v21
  %v23 = vcombine.high %v22, %v22
  %24 = vrot.lane.b32.xlu0 %v22, 112
  %v25 = vpop.permute.xlu0 %24
  %26 = vrot.lane.b32.xlu0 %v23, 112
  %v27 = vpop.permute.xlu0 %26
  %vm28 = vcmask 916480
  %v29 = vsel %vm28, %v25, %v27
  %v32 = vsel %vm28, %v27, 0.0
  %33 = vrot.lane.b32.xlu0 %v22, 16
  %v34 = vpop.permute.xlu0 %33
  %35 = vrot.lane.b32.xlu0 %v23, 16
  %v36 = vpop.permute.xlu0 %35
  %vm37 = vcmask 130048
  %v38 = vsel %vm37, %v34, %v36
  %v41 = vsel %vm37, 0.0, %v34
  %v42 = vsub.f32 %v29, %v41
  %v43 = vsub.f32 %v32, %v38
  %46 = vrot.lane.b32.xlu0 %v42, 1
  %v47 = vpop.permute.xlu0 %46
  %48 = vrot.lane.b32.xlu0 %v43, 1
  %v49 = vpop.permute.xlu0 %48
  %vm50 = vcmask 7168
  %v51 = vsel %vm50, %v47, %v49
  %v54 = vsel %vm50, 0.0, %v47
  %55 = vrot.lane.b32.xlu0 %v42, 127
  %v56 = vpop.permute.xlu0 %55
  %57 = vrot.lane.b32.xlu0 %v43, 127
  %v58 = vpop.permute.xlu0 %57
  %vm59 = vcmask 1039360
  %v60 = vsel %vm59, %v56, %v58
  %v63 = vsel %vm59, %v58, 0.0
  %v64 = vld [vmem:[%s0] sm:$0x3]
  %v66 = vlaneseq
  %v67 = vshrl.u32 %v66, 7
  %v68 = vsub.s32 0, %v67
  %v69 = vrot.slane %v64, %v68
  %v70 = vlaneseq
  %v71 = vshrl.u32 %v70, 7
  %v72 = vsub.s32 1, %v71
  %v73 = vrot.slane %v64, %v72
  %v76 = vmul.f32 %v69, %v54
  %v77 = vmul.f32 %v73, %v51
  %v78 = vmul.f32 %v42, 2.0
  %v79 = vmul.f32 %v43, 2.0
  %v80 = vadd.f32 %v76, %v78
  %v81 = vadd.f32 %v77, %v79
  %v82 = vld [vmem:[%s1] sm:$0x3]
  %v84 = vlaneseq
  %v85 = vshrl.u32 %v84, 7
  %v86 = vsub.s32 0, %v85
  %v87 = vrot.slane %v82, %v86
  %v88 = vlaneseq
  %v89 = vshrl.u32 %v88, 7
  %v90 = vsub.s32 1, %v89
  %v91 = vrot.slane %v82, %v90
  %v94 = vmul.f32 %v87, %v60
  %v95 = vmul.f32 %v91, %v63
  %v96 = vadd.f32 %v80, %v94
  %v97 = vadd.f32 %v81, %v95
  %v100 = vcombine.low %v96, %v97
  %v102 = vunpack.c.l.s4 1983009808
  %v103 = vunpack.c.0.s8 %v102
  %v104 = vlaneseq
  %v105 = vshrl.u32 %v104, 7
  %v106 = vsub.s32 %v103, %v105
  %v107 = vrot.slane %v100, %v106
  %109 = vst [vmem:[%s3] sm:$0xf] %v107
  // Predicated region
  $region14: #{horizontal_edge_conv.1} parent=0 // pred_check
    _
  $region15: #{horizontal_edge_conv.1} parent=0 // pred_check_branch
    %111 = sbr.rel (0) target = $region17
  $region16: #{horizontal_edge_conv.1} parent=0 // pred_region
    _
  $region17: #{horizontal_edge_conv.1} parent=0 // pred_fallthru
    _
  // Predicated region
  $region18: #{horizontal_edge_conv.1} parent=0 // pred_check
    _
  $region19: #{horizontal_edge_conv.1} parent=0 // pred_check_branch
    %113 = sbr.rel (0) target = $region21
  $region20: #{horizontal_edge_conv.1} parent=0 // pred_region
    _
  $region21: #{horizontal_edge_conv.1} parent=0 // pred_fallthru
    _

</llo_original>
